<compile_context>
chip_gen: v7x
topology: tpu7x:2x2x1
jax: 0.10.0
libtpu: 0.0.40
codegen_flags: <defaults>
</compile_context>

<pallas_src>
import functools
import math

import jax
import jax.numpy as jnp
from jax import lax
from jax.experimental import pallas as pl
from jax.experimental.pallas import tpu as pltpu

_EPS = 1e-8  # util.cos_sim eps clamp


def _ct_loss_kernel(scale_ref, a_ref, b_ref, loss_ref,
                    an_ref, mr_ref, lr_ref, cm_ref, cl_ref, acc_ref,
                    *, mm_dtype, inv_batch):
    """One (row-tile i, column-tile k) step of the symmetric-CE loss.

    scale_ref : (1,1) f32 SMEM   -- exp(logit_scale)
    a_ref     : (T, D)           -- rows of embeddings_a for row tile i
    b_ref     : (T, D)           -- rows of embeddings_b for column tile k
    loss_ref  : (1,1) f32 SMEM   -- scalar loss, written on the last grid step
    an_ref    : (T, D) mm_dtype VMEM -- cached (normalized * exp(scale)) a tile
    mr_ref/lr_ref : (T,1) f32 VMEM   -- running row max / sum-exp
    cm_ref/cl_ref : (nk,1,T) f32 VMEM -- running column max / sum-exp per col tile
    acc_ref   : (1,) f32 SMEM    -- running scalar loss accumulator
    """
    i = pl.program_id(0)
    k = pl.program_id(1)
    ni = pl.num_programs(0)
    nk = pl.num_programs(1)

    # ---- once per row tile: normalize + scale the a tile, reset row stats ----
    @pl.when(k == 0)
    def _():
        a = a_ref[...].astype(jnp.float32)
        inv_na = lax.rsqrt(
            jnp.maximum(jnp.sum(a * a, axis=-1, keepdims=True), _EPS * _EPS))
        # exp(logit_scale) folded into the row normalization -> no B^2 multiply.
        an_ref[...] = (a * (inv_na * scale_ref[0, 0])).astype(mm_dtype)
        mr_ref[...] = jnp.full(mr_ref.shape, -jnp.inf, mr_ref.dtype)
        lr_ref[...] = jnp.zeros(lr_ref.shape, lr_ref.dtype)

    # ---- once per kernel: reset the scalar accumulator ----
    @pl.when(jnp.logical_and(i == 0, k == 0))
    def _():
        acc_ref[0] = jnp.float32(0.0)

    # ---- normalize the current b (column) tile: f32 math, mm_dtype MXU operand
    b = b_ref[...].astype(jnp.float32)
    inv_nb = lax.rsqrt(
        jnp.maximum(jnp.sum(b * b, axis=-1, keepdims=True), _EPS * _EPS))
    bn = (b * inv_nb).astype(mm_dtype)
    an = an_ref[...]

    # scores tile (T, T): MXU contraction over D, f32 accumulation.
    s = lax.dot_general(an, bn,
                        dimension_numbers=(((1,), (1,)), ((), ())),
                        preferred_element_type=jnp.float32)

    # ---- diagonal of scores (only when the diagonal block is in view) ----
    @pl.when(k == i)
    def _():
        d = jnp.sum(an.astype(jnp.float32) * bn.astype(jnp.float32),
                    axis=-1, keepdims=True)                      # (T, 1)
        acc_ref[0] = acc_ref[0] - inv_batch * jnp.sum(d)

    # ---- row-wise online logsumexp (flash-style) ----
    m_prev = mr_ref[...]
    m_new = jnp.maximum(m_prev, jnp.max(s, axis=-1, keepdims=True))
    p = jnp.exp(s - m_new)
    lr_ref[...] = (lr_ref[...] * jnp.exp(m_prev - m_new)
                   + jnp.sum(p, axis=-1, keepdims=True))
    mr_ref[...] = m_new

    # ---- column-wise online logsumexp, merged across row tiles ----
    mc = jnp.max(s, axis=0, keepdims=True)                       # (1, T)
    lc = jnp.sum(jnp.exp(s - mc), axis=0, keepdims=True)         # (1, T)

    @pl.when(i == 0)
    def _():
        cm_ref[k] = mc
        cl_ref[k] = lc

    @pl.when(i > 0)
    def _():
        m_old = cm_ref[k]
        m_nw = jnp.maximum(m_old, mc)
        cl_ref[k] = cl_ref[k] * jnp.exp(m_old - m_nw) + lc * jnp.exp(mc - m_nw)
        cm_ref[k] = m_nw

    # ---- fold finished row-tile LSEs into the loss at end of each row sweep ----
    @pl.when(k == nk - 1)
    def _():
        row_lse = mr_ref[...] + jnp.log(lr_ref[...])
        acc_ref[0] = acc_ref[0] + 0.5 * inv_batch * jnp.sum(row_lse)

    # ---- fold finished column-tile LSEs once the last row tile is merged ----
    @pl.when(i == ni - 1)
    def _():
        col_lse = cm_ref[k] + jnp.log(cl_ref[k])
        acc_ref[0] = acc_ref[0] + 0.5 * inv_batch * jnp.sum(col_lse)

    # ---- emit the scalar loss on the very last grid step ----
    @pl.when(jnp.logical_and(i == ni - 1, k == nk - 1))
    def _():
        loss_ref[0, 0] = acc_ref[0]


def _pick_block(batch, dim):
    """Largest tile (multiple of 8, <=512) dividing `batch` whose double-buffered
    f32 a/b tiles stay within ~8 MiB; falls back to the whole batch."""
    budget = 8 * 1024 * 1024
    candidates = (512, 256, 128, 64, 32, 16, 8)
    for t in candidates:
        if batch % t == 0 and 4 * t * dim * 4 <= budget:
            return t
    for t in candidates:
        if batch % t == 0:
            return t
    return batch


def contrastive_tension_in_batch_negatives_loss(
        embeddings_a, embeddings_b, logit_scale, *,
        block=None, mm_dtype=jnp.bfloat16, interpret=False):
    """Forward pass of ContrastiveTensionLossInBatchNegatives.

    embeddings_a / embeddings_b: (B, D) outputs of model1 / model2.
    logit_scale: scalar parameter (log of the scale; the module applies .exp()).
    """
    batch, dim = embeddings_a.shape
    assert embeddings_b.shape == (batch, dim)
    if block is None:
        block = _pick_block(batch, dim)
    if batch % block != 0:
        raise ValueError(f"batch={batch} must be divisible by block={block}")
    n_tiles = batch // block

    # The module's forward does logit_scale.exp(); do the scalar exp once here
    # and fold the result into the kernel's a-side normalization.
    scale = jnp.exp(jnp.asarray(logit_scale, jnp.float32)).reshape(1, 1)

    kernel = functools.partial(_ct_loss_kernel, mm_dtype=mm_dtype,
                               inv_batch=1.0 / batch)

    in_itemsize = jnp.dtype(embeddings_a.dtype).itemsize
    mm_itemsize = jnp.dtype(mm_dtype).itemsize
    per_step_bytes = (
        2 * 2 * block * dim * in_itemsize      # double-buffered a / b input tiles
        + block * dim * mm_itemsize            # cached normalized+scaled a tile
        + 2 * n_tiles * block * 4              # column max / sum accumulators
        + 2 * block * 4                        # row max / sum accumulators
        + 4 * block * block * 4)               # scores tile + exp temporaries
    # >=32 MiB lifts the v5e 16 MiB scoped-VMEM default; cap at v7x physical.
    vmem_limit = int(min(64 * 1024 * 1024,
                         max(32 * 1024 * 1024, 2 * per_step_bytes)))

    out = pl.pallas_call(
        kernel,
        out_shape=jax.ShapeDtypeStruct((1, 1), jnp.float32),
        grid=(n_tiles, n_tiles),
        in_specs=[
            pl.BlockSpec(memory_space=pltpu.SMEM),              # exp(logit_scale)
            pl.BlockSpec((block, dim), lambda i, k: (i, 0)),    # a row tile
            pl.BlockSpec((block, dim), lambda i, k: (k, 0)),    # b column tile
        ],
        out_specs=pl.BlockSpec(memory_space=pltpu.SMEM),
        scratch_shapes=[
            pltpu.VMEM((block, dim), mm_dtype),            # cached scaled a tile
            pltpu.VMEM((block, 1), jnp.float32),           # running row max
            pltpu.VMEM((block, 1), jnp.float32),           # running row sum-exp
            pltpu.VMEM((n_tiles, 1, block), jnp.float32),  # running col max
            pltpu.VMEM((n_tiles, 1, block), jnp.float32),  # running col sum-exp
            pltpu.SMEM((1,), jnp.float32),                 # scalar loss accumulator
        ],
        compiler_params=pltpu.CompilerParams(
            # TODO(synk): row axis stays "arbitrary" because column-LSE / scalar
            # accumulators are carried across row tiles; v7x megacore would need
            # per-core partial outputs + a tiny epilogue to mark it "parallel".
            dimension_semantics=("arbitrary", "arbitrary"),
            vmem_limit_bytes=vmem_limit,
        ),
        interpret=interpret,
    )(scale, embeddings_a, embeddings_b)
    return out[0, 0]


def _reference_loss(emb_a, emb_b, logit_scale, mm_dtype=jnp.bfloat16):
    """Pure-JAX reference mirroring the PyTorch module (and the kernel's
    bf16-operand / f32-accumulate MXU precision)."""
    a = emb_a.astype(jnp.float32)
    b = emb_b.astype(jnp.float32)
    a_n = a / jnp.maximum(jnp.linalg.norm(a, axis=-1, keepdims=True), _EPS)
    b_n = b / jnp.maximum(jnp.linalg.norm(b, axis=-1, keepdims=True), _EPS)
    scale = jnp.exp(jnp.asarray(logit_scale, jnp.float32))
    scores = jnp.dot((a_n * scale).astype(mm_dtype), b_n.astype(mm_dtype).T,
                     preferred_element_type=jnp.float32)
    labels = jnp.arange(scores.shape[0])
    logp_r = jax.nn.log_softmax(scores, axis=1)
    logp_c = jax.nn.log_softmax(scores.T, axis=1)
    ce_r = -jnp.mean(logp_r[labels, labels])
    ce_c = -jnp.mean(logp_c[labels, labels])
    return 0.5 * (ce_r + ce_c)


if __name__ == "__main__":
    # Small, deterministic example: batch=32 sentence pairs, hidden dim=128.
    B, D = 32, 128
    key = jax.random.PRNGKey(0)
    ka, kb = jax.random.split(key)
    # Stand-ins for model1(...)["sentence_embedding"] / model2(...)["sentence_embedding"]
    embeddings_a = jax.random.normal(ka, (B, D), dtype=jnp.float32)
    embeddings_b = jax.random.normal(kb, (B, D), dtype=jnp.float32)

    # Parameter from __init__: logit_scale = log(scale), scale = 20.0
    logit_scale = jnp.asarray(math.log(20.0), dtype=jnp.float32)

    # Tiled path: 4x4 grid of 8x8 score tiles (exercises all accumulation paths).
    loss_tiled = contrastive_tension_in_batch_negatives_loss(
        embeddings_a, embeddings_b, logit_scale, block=8)
    loss_tiled = jax.block_until_ready(loss_tiled)

    # Auto-picked tile size (single-tile path here).
    loss_auto = contrastive_tension_in_batch_negatives_loss(
        embeddings_a, embeddings_b, logit_scale)
    loss_auto = jax.block_until_ready(loss_auto)

    ref = jax.block_until_ready(_reference_loss(embeddings_a, embeddings_b, logit_scale))
    assert jnp.allclose(loss_tiled, ref, rtol=2e-3, atol=2e-3), (loss_tiled, ref)
    assert jnp.allclose(loss_auto, ref, rtol=2e-3, atol=2e-3), (loss_auto, ref)

    print("KERNEL_OK")
</pallas_src>

<mosaic_0001>
module attributes {stable_mosaic.version = 11 : i64} {
  func.func @_ct_loss_kernel(%arg0: i32, %arg1: i32, %arg2: memref<1x1xf32, #tpu.memory_space<smem>>, %arg3: memref<8x128xf32, #tpu.memory_space<vmem>>, %arg4: memref<8x128xf32, #tpu.memory_space<vmem>>, %arg5: memref<1x1xf32, #tpu.memory_space<smem>>, %arg6: memref<8x128xbf16, #tpu.memory_space<vmem>>, %arg7: memref<8x1xf32, #tpu.memory_space<vmem>>, %arg8: memref<8x1xf32, #tpu.memory_space<vmem>>, %arg9: memref<4x1x8xf32, #tpu.memory_space<vmem>>, %arg10: memref<4x1x8xf32, #tpu.memory_space<vmem>>, %arg11: memref<1xf32, #tpu.memory_space<smem>>) attributes {dimension_semantics = [#tpu.dimension_semantics<arbitrary>, #tpu.dimension_semantics<arbitrary>], iteration_bounds = array<i64: 4, 4>, scalar_prefetch = 0 : i64, scratch_operands = 6 : i64, tpu.core_type = #tpu.core_type<tc>, window_params = [{transform_indices = @transform_0, window_bounds = array<i64: 1, 1>}, {transform_indices = @transform_1, window_bounds = array<i64: 8, 128>}, {transform_indices = @transform_2, window_bounds = array<i64: 8, 128>}, {transform_indices = @transform_3, window_bounds = array<i64: 1, 1>}]} {
    %c0_i32 = arith.constant 0 : i32
    %0 = arith.cmpi eq, %arg1, %c0_i32 : i32
    %1 = arith.extui %0 : i1 to i32
    %c0_i32_0 = arith.constant 0 : i32
    %2 = arith.cmpi ne, %1, %c0_i32_0 : i32
    scf.if %2 {
      %c0_32 = arith.constant 0 : index
      %c0_33 = arith.constant 0 : index
      %63 = vector.load %arg3[%c0_32, %c0_33] : memref<8x128xf32, #tpu.memory_space<vmem>>, vector<8x128xf32>
      %64 = arith.mulf %63, %63 : vector<8x128xf32>
      %cst_34 = arith.constant dense<0.000000e+00> : vector<8xf32>
      %65 = vector.multi_reduction <add>, %64, %cst_34 [1] : vector<8x128xf32> to vector<8xf32>
      %66 = vector.shape_cast %65 : vector<8xf32> to vector<8x1xf32>
      %cst_35 = arith.constant 1.000000e-16 : f32
      %67 = vector.broadcast %cst_35 : f32 to vector<8x1xf32>
      %68 = arith.maximumf %66, %67 : vector<8x1xf32>
      %69 = math.rsqrt %68 : vector<8x1xf32>
      %c0_36 = arith.constant 0 : index
      %c0_37 = arith.constant 0 : index
      %70 = memref.load %arg2[%c0_36, %c0_37] : memref<1x1xf32, #tpu.memory_space<smem>>
      %71 = vector.broadcast %70 : f32 to vector<8x1xf32>
      %72 = arith.mulf %69, %71 : vector<8x1xf32>
      %73 = vector.broadcast %72 : vector<8x1xf32> to vector<8x128xf32>
      %74 = arith.mulf %63, %73 : vector<8x128xf32>
      %75 = arith.truncf %74 : vector<8x128xf32> to vector<8x128xbf16>
      %c0_38 = arith.constant 0 : index
      %c0_39 = arith.constant 0 : index
      %76 = vector.load %arg6[%c0_38, %c0_39] : memref<8x128xbf16, #tpu.memory_space<vmem>>, vector<8x128xbf16>
      tpu.vector_store %arg6[%c0_38, %c0_39], %75 {strides = array<i32>} : memref<8x128xbf16, #tpu.memory_space<vmem>>, vector<8x128xbf16>,
      %cst_40 = arith.constant 0xFF800000 : f32
      %77 = vector.broadcast %cst_40 : f32 to vector<8x1xf32>
      %c0_41 = arith.constant 0 : index
      %c0_42 = arith.constant 0 : index
      %78 = vector.load %arg7[%c0_41, %c0_42] : memref<8x1xf32, #tpu.memory_space<vmem>>, vector<8x1xf32>
      tpu.vector_store %arg7[%c0_41, %c0_42], %77 {strides = array<i32>} : memref<8x1xf32, #tpu.memory_space<vmem>>, vector<8x1xf32>,
      %cst_43 = arith.constant 0.000000e+00 : f32
      %79 = vector.broadcast %cst_43 : f32 to vector<8x1xf32>
      %c0_44 = arith.constant 0 : index
      %c0_45 = arith.constant 0 : index
      %80 = vector.load %arg8[%c0_44, %c0_45] : memref<8x1xf32, #tpu.memory_space<vmem>>, vector<8x1xf32>
      tpu.vector_store %arg8[%c0_44, %c0_45], %79 {strides = array<i32>} : memref<8x1xf32, #tpu.memory_space<vmem>>, vector<8x1xf32>,
    } else {
    }
    %c0_i32_1 = arith.constant 0 : i32
    %3 = arith.cmpi eq, %arg0, %c0_i32_1 : i32
    %c0_i32_2 = arith.constant 0 : i32
    %4 = arith.cmpi eq, %arg1, %c0_i32_2 : i32
    %5 = arith.andi %3, %4 : i1
    %6 = arith.extui %5 : i1 to i32
    %c0_i32_3 = arith.constant 0 : i32
    %7 = arith.cmpi ne, %6, %c0_i32_3 : i32
    scf.if %7 {
      %cst_32 = arith.constant 0.000000e+00 : f32
      %c0_33 = arith.constant 0 : index
      %63 = memref.load %arg11[%c0_33] : memref<1xf32, #tpu.memory_space<smem>>
      memref.store %cst_32, %arg11[%c0_33] : memref<1xf32, #tpu.memory_space<smem>>
    } else {
    }
    %c0 = arith.constant 0 : index
    %c0_4 = arith.constant 0 : index
    %8 = vector.load %arg4[%c0, %c0_4] : memref<8x128xf32, #tpu.memory_space<vmem>>, vector<8x128xf32>
    %9 = arith.mulf %8, %8 : vector<8x128xf32>
    %cst = arith.constant dense<0.000000e+00> : vector<8xf32>
    %10 = vector.multi_reduction <add>, %9, %cst [1] : vector<8x128xf32> to vector<8xf32>
    %11 = vector.shape_cast %10 : vector<8xf32> to vector<8x1xf32>
    %cst_5 = arith.constant 1.000000e-16 : f32
    %12 = vector.broadcast %cst_5 : f32 to vector<8x1xf32>
    %13 = arith.maximumf %11, %12 : vector<8x1xf32>
    %14 = math.rsqrt %13 : vector<8x1xf32>
    %15 = vector.broadcast %14 : vector<8x1xf32> to vector<8x128xf32>
    %16 = arith.mulf %8, %15 : vector<8x128xf32>
    %17 = arith.truncf %16 : vector<8x128xf32> to vector<8x128xbf16>
    %c0_6 = arith.constant 0 : index
    %c0_7 = arith.constant 0 : index
    %18 = vector.load %arg6[%c0_6, %c0_7] : memref<8x128xbf16, #tpu.memory_space<vmem>>, vector<8x128xbf16>
    %cst_8 = arith.constant dense<0.000000e+00> : vector<8x8xf32>
    %19 = tpu.matmul %18, %17, %cst_8 {dimension_numbers = #tpu.dot_dimension_numbers<[1], [1], [0], [0], [0, 0, 1, 0], [], []>} : vector<8x128xbf16>, vector<8x128xbf16>, vector<8x8xf32> -> vector<8x8xf32>
    %20 = arith.cmpi eq, %arg1, %arg0 : i32
    %21 = arith.extui %20 : i1 to i32
    %c0_i32_9 = arith.constant 0 : i32
    %22 = arith.cmpi ne, %21, %c0_i32_9 : i32
    scf.if %22 {
      %63 = arith.extf %18 : vector<8x128xbf16> to vector<8x128xf32>
      %64 = arith.extf %17 : vector<8x128xbf16> to vector<8x128xf32>
      %65 = arith.mulf %63, %64 : vector<8x128xf32>
      %cst_32 = arith.constant dense<0.000000e+00> : vector<8xf32>
      %66 = vector.multi_reduction <add>, %65, %cst_32 [1] : vector<8x128xf32> to vector<8xf32>
      %67 = vector.shape_cast %66 : vector<8xf32> to vector<8x1xf32>
      %c0_33 = arith.constant 0 : index
      %68 = memref.load %arg11[%c0_33] : memref<1xf32, #tpu.memory_space<smem>>
      %69 = vector.shape_cast %67 : vector<8x1xf32> to vector<1x8x1xf32>
      %cst_34 = arith.constant dense<0.000000e+00> : vector<1xf32>
      %70 = vector.multi_reduction <add>, %69, %cst_34 [1, 2] : vector<1x8x1xf32> to vector<1xf32>
      %71 = vector.shape_cast %70 : vector<1xf32> to vector<1x1x1xf32>
      %72 = vector.extract %71[0, 0, 0] : f32 from vector<1x1x1xf32>
      %cst_35 = arith.constant 3.125000e-02 : f32
      %73 = arith.mulf %cst_35, %72 : f32
      %74 = arith.subf %68, %73 : f32
      %c0_36 = arith.constant 0 : index
      %75 = memref.load %arg11[%c0_36] : memref<1xf32, #tpu.memory_space<smem>>
      memref.store %74, %arg11[%c0_36] : memref<1xf32, #tpu.memory_space<smem>>
    } else {
    }
    %c0_10 = arith.constant 0 : index
    %c0_11 = arith.constant 0 : index
    %23 = vector.load %arg7[%c0_10, %c0_11] : memref<8x1xf32, #tpu.memory_space<vmem>>, vector<8x1xf32>
    %cst_12 = arith.constant dense<0xFF800000> : vector<8xf32>
    %24 = vector.multi_reduction <maximumf>, %19, %cst_12 [1] : vector<8x8xf32> to vector<8xf32>
    %25 = vector.shape_cast %24 : vector<8xf32> to vector<8x1xf32>
    %26 = arith.maximumf %23, %25 : vector<8x1xf32>
    %27 = vector.broadcast %26 : vector<8x1xf32> to vector<8x8xf32>
    %28 = arith.subf %19, %27 : vector<8x8xf32>
    %29 = math.exp %28 : vector<8x8xf32>
    %c0_13 = arith.constant 0 : index
    %c0_14 = arith.constant 0 : index
    %30 = vector.load %arg8[%c0_13, %c0_14] : memref<8x1xf32, #tpu.memory_space<vmem>>, vector<8x1xf32>
    %31 = arith.subf %23, %26 : vector<8x1xf32>
    %32 = math.exp %31 : vector<8x1xf32>
    %33 = arith.mulf %30, %32 : vector<8x1xf32>
    %cst_15 = arith.constant dense<0.000000e+00> : vector<8xf32>
    %34 = vector.multi_reduction <add>, %29, %cst_15 [1] : vector<8x8xf32> to vector<8xf32>
    %35 = vector.shape_cast %34 : vector<8xf32> to vector<8x1xf32>
    %36 = arith.addf %33, %35 : vector<8x1xf32>
    %c0_16 = arith.constant 0 : index
    %c0_17 = arith.constant 0 : index
    %37 = vector.load %arg8[%c0_16, %c0_17] : memref<8x1xf32, #tpu.memory_space<vmem>>, vector<8x1xf32>
    tpu.vector_store %arg8[%c0_16, %c0_17], %36 {strides = array<i32>} : memref<8x1xf32, #tpu.memory_space<vmem>>, vector<8x1xf32>,
    %c0_18 = arith.constant 0 : index
    %c0_19 = arith.constant 0 : index
    %38 = vector.load %arg7[%c0_18, %c0_19] : memref<8x1xf32, #tpu.memory_space<vmem>>, vector<8x1xf32>
    tpu.vector_store %arg7[%c0_18, %c0_19], %26 {strides = array<i32>} : memref<8x1xf32, #tpu.memory_space<vmem>>, vector<8x1xf32>,
    %cst_20 = arith.constant dense<0xFF800000> : vector<8xf32>
    %39 = vector.multi_reduction <maximumf>, %19, %cst_20 [0] : vector<8x8xf32> to vector<8xf32>
    %40 = vector.shape_cast %39 : vector<8xf32> to vector<1x8xf32>
    %41 = vector.broadcast %40 : vector<1x8xf32> to vector<8x8xf32>
    %42 = arith.subf %19, %41 : vector<8x8xf32>
    %43 = math.exp %42 : vector<8x8xf32>
    %cst_21 = arith.constant dense<0.000000e+00> : vector<8xf32>
    %44 = vector.multi_reduction <add>, %43, %cst_21 [0] : vector<8x8xf32> to vector<8xf32>
    %45 = vector.shape_cast %44 : vector<8xf32> to vector<1x8xf32>
    %c0_i32_22 = arith.constant 0 : i32
    %46 = arith.cmpi eq, %arg0, %c0_i32_22 : i32
    %47 = arith.extui %46 : i1 to i32
    %c0_i32_23 = arith.constant 0 : i32
    %48 = arith.cmpi ne, %47, %c0_i32_23 : i32
    scf.if %48 {
      %63 = arith.index_cast %arg1 : i32 to index
      %c0_32 = arith.constant 0 : index
      %c0_33 = arith.constant 0 : index
      %64 = vector.load %arg9[%63, %c0_32, %c0_33] : memref<4x1x8xf32, #tpu.memory_space<vmem>>, vector<1x1x8xf32>
      %65 = vector.shape_cast %64 : vector<1x1x8xf32> to vector<1x8xf32>
      %66 = vector.shape_cast %40 : vector<1x8xf32> to vector<1x1x8xf32>
      tpu.vector_store %arg9[%63, %c0_32, %c0_33], %66 {strides = array<i32>} : memref<4x1x8xf32, #tpu.memory_space<vmem>>, vector<1x1x8xf32>,
      %67 = arith.index_cast %arg1 : i32 to index
      %c0_34 = arith.constant 0 : index
      %c0_35 = arith.constant 0 : index
      %68 = vector.load %arg10[%67, %c0_34, %c0_35] : memref<4x1x8xf32, #tpu.memory_space<vmem>>, vector<1x1x8xf32>
      %69 = vector.shape_cast %68 : vector<1x1x8xf32> to vector<1x8xf32>
      %70 = vector.shape_cast %45 : vector<1x8xf32> to vector<1x1x8xf32>
      tpu.vector_store %arg10[%67, %c0_34, %c0_35], %70 {strides = array<i32>} : memref<4x1x8xf32, #tpu.memory_space<vmem>>, vector<1x1x8xf32>,
    } else {
    }
    %c0_i32_24 = arith.constant 0 : i32
    %49 = arith.cmpi sgt, %arg0, %c0_i32_24 : i32
    %50 = arith.extui %49 : i1 to i32
    %c0_i32_25 = arith.constant 0 : i32
    %51 = arith.cmpi ne, %50, %c0_i32_25 : i32
    scf.if %51 {
      %63 = arith.index_cast %arg1 : i32 to index
      %c0_32 = arith.constant 0 : index
      %c0_33 = arith.constant 0 : index
      %64 = vector.load %arg9[%63, %c0_32, %c0_33] : memref<4x1x8xf32, #tpu.memory_space<vmem>>, vector<1x1x8xf32>
      %65 = vector.shape_cast %64 : vector<1x1x8xf32> to vector<1x8xf32>
      %66 = arith.maximumf %65, %40 : vector<1x8xf32>
      %67 = arith.index_cast %arg1 : i32 to index
      %c0_34 = arith.constant 0 : index
      %c0_35 = arith.constant 0 : index
      %68 = vector.load %arg10[%67, %c0_34, %c0_35] : memref<4x1x8xf32, #tpu.memory_space<vmem>>, vector<1x1x8xf32>
      %69 = vector.shape_cast %68 : vector<1x1x8xf32> to vector<1x8xf32>
      %70 = arith.subf %65, %66 : vector<1x8xf32>
      %71 = math.exp %70 : vector<1x8xf32>
      %72 = arith.mulf %69, %71 : vector<1x8xf32>
      %73 = arith.subf %40, %66 : vector<1x8xf32>
      %74 = math.exp %73 : vector<1x8xf32>
      %75 = arith.mulf %45, %74 : vector<1x8xf32>
      %76 = arith.addf %72, %75 : vector<1x8xf32>
      %77 = arith.index_cast %arg1 : i32 to index
      %c0_36 = arith.constant 0 : index
      %c0_37 = arith.constant 0 : index
      %78 = vector.load %arg10[%77, %c0_36, %c0_37] : memref<4x1x8xf32, #tpu.memory_space<vmem>>, vector<1x1x8xf32>
      %79 = vector.shape_cast %78 : vector<1x1x8xf32> to vector<1x8xf32>
      %80 = vector.shape_cast %76 : vector<1x8xf32> to vector<1x1x8xf32>
      tpu.vector_store %arg10[%77, %c0_36, %c0_37], %80 {strides = array<i32>} : memref<4x1x8xf32, #tpu.memory_space<vmem>>, vector<1x1x8xf32>,
      %81 = arith.index_cast %arg1 : i32 to index
      %c0_38 = arith.constant 0 : index
      %c0_39 = arith.constant 0 : index
      %82 = vector.load %arg9[%81, %c0_38, %c0_39] : memref<4x1x8xf32, #tpu.memory_space<vmem>>, vector<1x1x8xf32>
      %83 = vector.shape_cast %82 : vector<1x1x8xf32> to vector<1x8xf32>
      %84 = vector.shape_cast %66 : vector<1x8xf32> to vector<1x1x8xf32>
      tpu.vector_store %arg9[%81, %c0_38, %c0_39], %84 {strides = array<i32>} : memref<4x1x8xf32, #tpu.memory_space<vmem>>, vector<1x1x8xf32>,
    } else {
    }
    %c3_i32 = arith.constant 3 : i32
    %52 = arith.cmpi eq, %arg1, %c3_i32 : i32
    %53 = arith.extui %52 : i1 to i32
    %c0_i32_26 = arith.constant 0 : i32
    %54 = arith.cmpi ne, %53, %c0_i32_26 : i32
    scf.if %54 {
      %c0_32 = arith.constant 0 : index
      %c0_33 = arith.constant 0 : index
      %63 = vector.load %arg7[%c0_32, %c0_33] : memref<8x1xf32, #tpu.memory_space<vmem>>, vector<8x1xf32>
      %c0_34 = arith.constant 0 : index
      %c0_35 = arith.constant 0 : index
      %64 = vector.load %arg8[%c0_34, %c0_35] : memref<8x1xf32, #tpu.memory_space<vmem>>, vector<8x1xf32>
      %65 = math.log %64 : vector<8x1xf32>
      %66 = arith.addf %63, %65 : vector<8x1xf32>
      %c0_36 = arith.constant 0 : index
      %67 = memref.load %arg11[%c0_36] : memref<1xf32, #tpu.memory_space<smem>>
      %68 = vector.shape_cast %66 : vector<8x1xf32> to vector<1x8x1xf32>
      %cst_37 = arith.constant dense<0.000000e+00> : vector<1xf32>
      %69 = vector.multi_reduction <add>, %68, %cst_37 [1, 2] : vector<1x8x1xf32> to vector<1xf32>
      %70 = vector.shape_cast %69 : vector<1xf32> to vector<1x1x1xf32>
      %71 = vector.extract %70[0, 0, 0] : f32 from vector<1x1x1xf32>
      %cst_38 = arith.constant 1.562500e-02 : f32
      %72 = arith.mulf %cst_38, %71 : f32
      %73 = arith.addf %67, %72 : f32
      %c0_39 = arith.constant 0 : index
      %74 = memref.load %arg11[%c0_39] : memref<1xf32, #tpu.memory_space<smem>>
      memref.store %73, %arg11[%c0_39] : memref<1xf32, #tpu.memory_space<smem>>
    } else {
    }
    %c3_i32_27 = arith.constant 3 : i32
    %55 = arith.cmpi eq, %arg0, %c3_i32_27 : i32
    %56 = arith.extui %55 : i1 to i32
    %c0_i32_28 = arith.constant 0 : i32
    %57 = arith.cmpi ne, %56, %c0_i32_28 : i32
    scf.if %57 {
      %63 = arith.index_cast %arg1 : i32 to index
      %c0_32 = arith.constant 0 : index
      %c0_33 = arith.constant 0 : index
      %64 = vector.load %arg9[%63, %c0_32, %c0_33] : memref<4x1x8xf32, #tpu.memory_space<vmem>>, vector<1x1x8xf32>
      %65 = vector.shape_cast %64 : vector<1x1x8xf32> to vector<1x8xf32>
      %66 = arith.index_cast %arg1 : i32 to index
      %c0_34 = arith.constant 0 : index
      %c0_35 = arith.constant 0 : index
      %67 = vector.load %arg10[%66, %c0_34, %c0_35] : memref<4x1x8xf32, #tpu.memory_space<vmem>>, vector<1x1x8xf32>
      %68 = vector.shape_cast %67 : vector<1x1x8xf32> to vector<1x8xf32>
      %69 = math.log %68 : vector<1x8xf32>
      %70 = arith.addf %65, %69 : vector<1x8xf32>
      %c0_36 = arith.constant 0 : index
      %71 = memref.load %arg11[%c0_36] : memref<1xf32, #tpu.memory_space<smem>>
      %72 = vector.shape_cast %70 : vector<1x8xf32> to vector<1x1x8xf32>
      %cst_37 = arith.constant dense<0.000000e+00> : vector<1xf32>
      %73 = vector.multi_reduction <add>, %72, %cst_37 [1, 2] : vector<1x1x8xf32> to vector<1xf32>
      %74 = vector.shape_cast %73 : vector<1xf32> to vector<1x1x1xf32>
      %75 = vector.extract %74[0, 0, 0] : f32 from vector<1x1x1xf32>
      %cst_38 = arith.constant 1.562500e-02 : f32
      %76 = arith.mulf %cst_38, %75 : f32
      %77 = arith.addf %71, %76 : f32
      %c0_39 = arith.constant 0 : index
      %78 = memref.load %arg11[%c0_39] : memref<1xf32, #tpu.memory_space<smem>>
      memref.store %77, %arg11[%c0_39] : memref<1xf32, #tpu.memory_space<smem>>
    } else {
    }
    %c3_i32_29 = arith.constant 3 : i32
    %58 = arith.cmpi eq, %arg0, %c3_i32_29 : i32
    %c3_i32_30 = arith.constant 3 : i32
    %59 = arith.cmpi eq, %arg1, %c3_i32_30 : i32
    %60 = arith.andi %58, %59 : i1
    %61 = arith.extui %60 : i1 to i32
    %c0_i32_31 = arith.constant 0 : i32
    %62 = arith.cmpi ne, %61, %c0_i32_31 : i32
    scf.if %62 {
      %c0_32 = arith.constant 0 : index
      %63 = memref.load %arg11[%c0_32] : memref<1xf32, #tpu.memory_space<smem>>
      %c0_33 = arith.constant 0 : index
      %c0_34 = arith.constant 0 : index
      %64 = memref.load %arg5[%c0_33, %c0_34] : memref<1x1xf32, #tpu.memory_space<smem>>
      memref.store %63, %arg5[%c0_33, %c0_34] : memref<1x1xf32, #tpu.memory_space<smem>>
    } else {
    }
    return
  }
  func.func @transform_0(%arg0: i32, %arg1: i32) -> (i32, i32) {
    %c0_i32 = arith.constant 0 : i32
    %c0_i32_0 = arith.constant 0 : i32
    %c0_i32_1 = arith.constant 0 : i32
    return %c0_i32, %c0_i32_0 : i32, i32
  }
  func.func @transform_1(%arg0: i32, %arg1: i32) -> (i32, i32) {
    %c0_i32 = arith.constant 0 : i32
    %c0_i32_0 = arith.constant 0 : i32
    return %arg0, %c0_i32 : i32, i32
  }
  func.func @transform_2(%arg0: i32, %arg1: i32) -> (i32, i32) {
    %c0_i32 = arith.constant 0 : i32
    %c0_i32_0 = arith.constant 0 : i32
    return %arg1, %c0_i32 : i32, i32
  }
  func.func @transform_3(%arg0: i32, %arg1: i32) -> (i32, i32) {
    %c0_i32 = arith.constant 0 : i32
    %c0_i32_0 = arith.constant 0 : i32
    %c0_i32_1 = arith.constant 0 : i32
    return %c0_i32, %c0_i32_0 : i32, i32
  }
}

</mosaic_0001>

<llo_original>
// kernel: tpu_custom_call.1
$region0: #{tpu_custom_call.1}
  #allocation0 [shape = 'u32[]', space=smem, size = 0x4, offset = 0x4, fixed_abs, tag = 'smem constant byte address 0x4 - core index']
  #allocation1 [shape = 'u32[144,128]{1,0:T(1,128)}', space=vmem, size = 0x12000, scoped, tag = 'internal scratch']
  #allocation2 [shape = 'bf16[8,128]{1,0:T(8,128)(2,1)}', space=vmem, size = 0x800, scoped, tag = 'scratch operand']
  #allocation3 [shape = 'f32[8,1]{1,0:T(8,128)}', space=vmem, size = 0x1000, scoped, tag = 'scratch operand']
  #allocation4 [shape = 'f32[8,1]{1,0:T(8,128)}', space=vmem, size = 0x1000, scoped, tag = 'scratch operand']
  #allocation5 [shape = 'f32[4,1,8]{2,1,0:T(1,128)}', space=vmem, size = 0x800, scoped, tag = 'scratch operand']
  #allocation6 [shape = 'f32[4,1,8]{2,1,0:T(1,128)}', space=vmem, size = 0x800, scoped, tag = 'scratch operand']
  #allocation7 [shape = 'f32[1]{0:T(128)}', space=smem, size = 0x200, scoped, tag = 'scratch operand']
  #allocation8 [shape = 'f32[1,1]{1,0:T(1,128)S(6)}', space=smem, size = 0x200, scoped, tag = 'scoped memory for tpu_custom_call.1']
  %s0 = inlined_call_operand.<no memory space> [shape: f32[1,1], index: 0, kind: input, shape index: {}]
  %s1 = inlined_call_operand.hbm [shape: f32[32,128], index: 1, kind: input, shape index: {}]
  %s2 = inlined_call_operand.hbm [shape: f32[32,128], index: 2, kind: input, shape index: {}]
  %s3 = inlined_call_operand.hbm [shape: f32[1,1], index: 3, kind: output, shape index: {}]
  %s4 = sld [smem:[#allocation0]]
  $region85: #{tpu_custom_call.1} parent=0
    _
  %s6 = ssub.s32 1, %s4
  %s7 = scalar_select 0, %s6, %s4
  %8 = sst [smem:[#allocation8]] %s0
  $region1: #{tpu_custom_call.1} parent=0
    #allocation9 [shape = 'u8[8192]{0}', space=vmem, size = 0x2000, scoped, tag = 'input window, operand 1']
    #allocation10 [shape = 's32[2]{0}', space=sflag, size = 0x8, scoped, tag = 'scoped memory for tpu_custom_call.1']
    #allocation11 [shape = 's32[2]{0}', space=sflag, size = 0x8, scoped, tag = 'scoped memory for tpu_custom_call.1']
    #allocation12 [shape = 'u8[8192]{0}', space=vmem, size = 0x2000, scoped, tag = 'input window, operand 2']
    #allocation13 [shape = 's32[2]{0}', space=sflag, size = 0x8, scoped, tag = 'scoped memory for tpu_custom_call.1']
    #allocation14 [shape = 'u8[512]{0}', space=smem, size = 0x200, scoped, tag = 'output window, operand 0, single buffered']
    %9 = vsyncpa [#allocation10], 0
    %s10 = scalar_lea.sflag [#allocation10], 1
    %11 = vsyncpa %s10, 0
    %12 = vsyncpa [#allocation13], 0
    %s13 = scalar_lea.sflag [#allocation13], 1
    %14 = vsyncpa %s13, 0
    %15 = vsyncpa [#allocation11], 0
    loop: start=0, step=1, limit=18
    $region2: #{tpu_custom_call.1} parent=1 // loop_pre_header
      _
    $region3: #{tpu_custom_call.1} parent=1 // loop_header
      %s17 = sphi 0, %s21
      %p18 = scmp.ge.s32.totalorder %s17, 18
      %s24 = sphi 0, %s36
      %s25 = sphi 0, %s32
      %s26 = sphi 0, %s24
      %s27 = sphi 0, %s25
      %s28 = sphi 0, %s26
      %s29 = sphi 0, %s27
      %s37 = sphi 0, %s37
      %s39 = sphi 0, %s37
      %s40 = sphi 0, %s39
      %s54 = sphi 0, %s40
      %s60 = sphi 0, %s62
      %s63 = sphi 0, %s60
      %s64 = sphi 0, %s63
      %s80 = sphi 0, %s64
      %s86 = sphi 0, %s88
      %s89 = sphi 0, %s86
      %s90 = sphi 0, %s89
      %s106 = sphi 0, %s90
      %s110 = sphi 0, %s110
      %s112 = sphi 0, %s110
      %s113 = sphi 0, %s112
      %s127 = sphi 0, %s113
    $region4: #{tpu_custom_call.1} parent=1 // loop_header_branch
      %20 = sbr.rel (%p18) target = $region8
    $region5: #{tpu_custom_call.1} parent=1 // loop_body
      %s22 = ssub.s32 %s17, 1
      %s23 = ssub.s32 %s17, 2
      %s30 = sadd.s32 1, %s25
      %p31 = scmp.ge.s32.totalorder %s30, 4
      %s32 = scalar_select %p31, 0, %s30
      %s33 = sadd.s32 1, %s24
      %s34 = scalar_select %p31, %s33, %s24
      %p35 = scmp.ge.s32.totalorder %s34, 4
      %s36 = scalar_select %p35, 0, %s34
      %s38 = sadd.s32 %s37, 1
      %p41 = scmp.eq.s32.totalorder %s17, 15
      %p42 = scmp.ne.s32.totalorder %s37, %s39
      %p43 = scmp.eq.s32.totalorder %s17, 0
      %p44 = por %p42, %p43
      %p45 = scmp.ne.s32.totalorder %s37, %s39
      %p46 = scmp.eq.s32.totalorder %s22, 15
      %p47 = por %p45, %p46
      %p48 = scmp.ne.s32.totalorder %s39, %s40
      %p49 = scmp.eq.s32.totalorder %s22, 0
      %p50 = por %p48, %p49
      %p51 = scmp.ne.s32.totalorder %s39, %s40
      %p52 = scmp.eq.s32.totalorder %s23, 15
      %p53 = por %p51, %p52
      %p55 = scmp.ne.s32.totalorder %s40, %s54
      %p56 = scmp.eq.s32.totalorder %s23, 0
      %p57 = por %p55, %p56
      %s58 = ssub.s32 %s24, %s36
      %p59 = scmp.eq.s32.totalorder %s58, 0
      %s61 = sadd.s32 %s60, 1
      %s62 = scalar_select %p59, %s60, %s61
      %p65 = pneg %p59
      %p66 = scmp.eq.s32.totalorder %s17, 15
      %p67 = por %p65, %p66
      %p68 = scmp.ne.s32.totalorder %s60, %s63
      %p69 = scmp.eq.s32.totalorder %s17, 0
      %p70 = por %p68, %p69
      %p71 = scmp.ne.s32.totalorder %s60, %s63
      %p72 = scmp.eq.s32.totalorder %s22, 15
      %p73 = por %p71, %p72
      %p74 = scmp.ne.s32.totalorder %s63, %s64
      %p75 = scmp.eq.s32.totalorder %s22, 0
      %p76 = por %p74, %p75
      %p77 = scmp.ne.s32.totalorder %s63, %s64
      %p78 = scmp.eq.s32.totalorder %s23, 15
      %p79 = por %p77, %p78
      %p81 = scmp.ne.s32.totalorder %s64, %s80
      %p82 = scmp.eq.s32.totalorder %s23, 0
      %p83 = por %p81, %p82
      %s84 = ssub.s32 %s25, %s32
      %p85 = scmp.eq.s32.totalorder %s84, 0
      %s87 = sadd.s32 %s86, 1
      %s88 = scalar_select %p85, %s86, %s87
      %p91 = pneg %p85
      %p92 = scmp.eq.s32.totalorder %s17, 15
      %p93 = por %p91, %p92
      %p94 = scmp.ne.s32.totalorder %s86, %s89
      %p95 = scmp.eq.s32.totalorder %s17, 0
      %p96 = por %p94, %p95
      %p97 = scmp.ne.s32.totalorder %s86, %s89
      %p98 = scmp.eq.s32.totalorder %s22, 15
      %p99 = por %p97, %p98
      %p100 = scmp.ne.s32.totalorder %s89, %s90
      %p101 = scmp.eq.s32.totalorder %s22, 0
      %p102 = por %p100, %p101
      %p103 = scmp.ne.s32.totalorder %s89, %s90
      %p104 = scmp.eq.s32.totalorder %s23, 15
      %p105 = por %p103, %p104
      %p107 = scmp.ne.s32.totalorder %s90, %s106
      %p108 = scmp.eq.s32.totalorder %s23, 0
      %p109 = por %p107, %p108
      %s111 = sadd.s32 %s110, 1
      %p114 = scmp.eq.s32.totalorder %s17, 15
      %p115 = scmp.ne.s32.totalorder %s110, %s112
      %p116 = scmp.eq.s32.totalorder %s17, 0
      %p117 = por %p115, %p116
      %p118 = scmp.ne.s32.totalorder %s110, %s112
      %p119 = scmp.eq.s32.totalorder %s22, 15
      %p120 = por %p118, %p119
      %p121 = scmp.ne.s32.totalorder %s112, %s113
      %p122 = scmp.eq.s32.totalorder %s22, 0
      %p123 = por %p121, %p122
      %p124 = scmp.ne.s32.totalorder %s112, %s113
      %p125 = scmp.eq.s32.totalorder %s23, 15
      %p126 = por %p124, %p125
      %p128 = scmp.ne.s32.totalorder %s113, %s127
      %p129 = scmp.eq.s32.totalorder %s23, 0
      %p130 = por %p128, %p129
      %p131 = scmp.le.s32.totalorder 1, %s17
      %p132 = scmp.lt.s32.totalorder %s17, 17
      %p133 = pnand %p131, %p132
      %p134 = pneg %p133
      // Predicated region
      $region9: #{tpu_custom_call.1} parent=5 // pred_check
        _
      $region10: #{tpu_custom_call.1} parent=5 // pred_check_branch
        %136 = sbr.rel (%p133) target = $region12
      $region11: #{tpu_custom_call.1} parent=5 // pred_region
        %s137 = ssub.s32 %s17, 1
        // Predicated region
        $region13: #{tpu_custom_call.1} parent=11 // pred_check
          %p138 = pneg %p50
        $region14: #{tpu_custom_call.1} parent=11 // pred_check_branch
          %140 = sbr.rel (%p138) target = $region16
        $region15: #{tpu_custom_call.1} parent=11 // pred_region
          _
        $region16: #{tpu_custom_call.1} parent=11 // pred_fallthru
          _
      $region12: #{tpu_custom_call.1} parent=5 // pred_fallthru
        _
      %p141 = scmp.lt.s32.totalorder %s17, 16
      // Predicated region
      $region17: #{tpu_custom_call.1} parent=5 // pred_check
        %p142 = pneg %p141
      $region18: #{tpu_custom_call.1} parent=5 // pred_check_branch
        %144 = sbr.rel (%p142) target = $region20
      $region19: #{tpu_custom_call.1} parent=5 // pred_region
        // Predicated region
        $region21: #{tpu_custom_call.1} parent=19 // pred_check
          %p145 = pneg %p70
        $region22: #{tpu_custom_call.1} parent=19 // pred_check_branch
          %147 = sbr.rel (%p145) target = $region24
        $region23: #{tpu_custom_call.1} parent=19 // pred_region
          %s148 = sand.u32 %s60, 1
          %s149 = scalar_lea.sflag [#allocation10], %s148
          %s150 = sand.u32 %s60, 1
          %s151 = smul.addr %s150, 8
          %s152 = scalar_lea.vmem [#allocation9], %s151
          %s154 = ssub.s32 128, 128
          %155 = vsyncadd %s149, %s154
          %s156 = smul.addr %s24, 128
          %s157 = scalar_lea.hbm %s1, %s156
          %s159 = sshll.u32 %s152, 4
          %s160 = int_to_ptr.vmem [resolvable:$true] %s159
          %162 = dma.hbm_to_vmem [thread:$0]  %s157, 128, %s160, %s149
        $region24: #{tpu_custom_call.1} parent=19 // pred_fallthru
          _
        // Predicated region
        $region25: #{tpu_custom_call.1} parent=19 // pred_check
          %p163 = pneg %p96
        $region26: #{tpu_custom_call.1} parent=19 // pred_check_branch
          %165 = sbr.rel (%p163) target = $region28
        $region27: #{tpu_custom_call.1} parent=19 // pred_region
          %s166 = sand.u32 %s86, 1
          %s167 = scalar_lea.sflag [#allocation13], %s166
          %s168 = sand.u32 %s86, 1
          %s169 = smul.addr %s168, 8
          %s170 = scalar_lea.vmem [#allocation12], %s169
          %s172 = ssub.s32 128, 128
          %173 = vsyncadd %s167, %s172
          %s174 = smul.addr %s25, 128
          %s175 = scalar_lea.hbm %s2, %s174
          %s177 = sshll.u32 %s170, 4
          %s178 = int_to_ptr.vmem [resolvable:$true] %s177
          %180 = dma.hbm_to_vmem [thread:$0]  %s175, 128, %s178, %s167
        $region28: #{tpu_custom_call.1} parent=19 // pred_fallthru
          _
      $region20: #{tpu_custom_call.1} parent=5 // pred_fallthru
        _
      %p181 = scmp.le.s32.totalorder 1, %s17
      %p182 = scmp.lt.s32.totalorder %s17, 17
      %p183 = pnand %p181, %p182
      %p184 = pneg %p183
      // Predicated region
      $region29: #{tpu_custom_call.1} parent=5 // pred_check
        _
      $region30: #{tpu_custom_call.1} parent=5 // pred_check_branch
        %186 = sbr.rel (%p183) target = $region32
      $region31: #{tpu_custom_call.1} parent=5 // pred_region
        %s187 = ssub.s32 %s17, 1
        %s188 = sand.u32 %s63, 1
        %s189 = scalar_lea.sflag [#allocation10], %s188
        %s190 = sand.u32 %s63, 1
        %s191 = smul.addr %s190, 8
        %s192 = scalar_lea.vmem [#allocation9], %s191
        // Predicated region
        $region33: #{tpu_custom_call.1} parent=31 // pred_check
          %p193 = pneg %p76
        $region34: #{tpu_custom_call.1} parent=31 // pred_check_branch
          %195 = sbr.rel (%p193) target = $region36
        $region35: #{tpu_custom_call.1} parent=31 // pred_region
          %196 = dma.done %s189, 128
        $region36: #{tpu_custom_call.1} parent=31 // pred_fallthru
          _
        %s197 = sand.u32 %s89, 1
        %s198 = scalar_lea.sflag [#allocation13], %s197
        %s199 = sand.u32 %s89, 1
        %s200 = smul.addr %s199, 8
        %s201 = scalar_lea.vmem [#allocation12], %s200
        // Predicated region
        $region37: #{tpu_custom_call.1} parent=31 // pred_check
          %p202 = pneg %p102
        $region38: #{tpu_custom_call.1} parent=31 // pred_check_branch
          %204 = sbr.rel (%p202) target = $region40
        $region39: #{tpu_custom_call.1} parent=31 // pred_region
          %205 = dma.done %s198, 128
        $region40: #{tpu_custom_call.1} parent=31 // pred_fallthru
          _
        %p206 = pneg %p50
        %p207 = pneg %p47
        %s208 = sand.u32 %s63, 1
        %s209 = scalar_lea.sflag [#allocation10], %s208
        %s210 = sand.u32 %s63, 1
        %s211 = smul.addr %s210, 8
        %s212 = scalar_lea.vmem [#allocation9], %s211
        %p213 = pneg %p76
        %p214 = pneg %p73
        %s215 = sand.u32 %s89, 1
        %s216 = scalar_lea.sflag [#allocation13], %s215
        %s217 = sand.u32 %s89, 1
        %s218 = smul.addr %s217, 8
        %s219 = scalar_lea.vmem [#allocation12], %s218
        %p220 = pneg %p102
        %p221 = pneg %p99
        %p222 = pneg %p123
        %p223 = pneg %p120
        %p225 = scmp.eq.s32.totalorder %s27, 0
        // Predicated region
        $region41: #{tpu_custom_call.1} parent=31 // pred_check
          %p226 = pneg %p225
        $region42: #{tpu_custom_call.1} parent=31 // pred_check_branch
          %228 = sbr.rel (%p226) target = $region44
        $region43: #{tpu_custom_call.1} parent=31 // pred_region
          %v229 = vld [vmem:[%s192] sm:$0xff]
          %v230 = vmul.f32 %v229, %v229
          %231 = vadd.xlane.f32.xlu0 %v230
          %v232 = vpop.xlane.xlu0 %231
          %v233 = vmax.f32 %v232, 1e-16
          %v234 = vrsqrt.pop %v233
          %s235 = sld [smem:[#allocation8]]
          %v236 = vstv %s235
          %v237 = vmul.f32 %v234, %v236
          %v238 = vmul.f32 %v229, %v237
          %v239 = vpack.c.bf16 %v238, %v238
          %240 = vst [vmem:[#allocation2] sm:$0xf] %v239
          %vm241 = vcmask 7168
          %242 = vst.msk [vmem:[#allocation3] sm:$0xff] %vm241, -inf
          %243 = vst.msk [vmem:[#allocation4] sm:$0xff] %vm241, 0.0
        $region44: #{tpu_custom_call.1} parent=31 // pred_fallthru
          _
        %p244 = scmp.eq.s32.totalorder %s26, 0
        %p245 = pnand %p244, %p225
        %p246 = pneg %p245
        // Predicated region
        $region45: #{tpu_custom_call.1} parent=31 // pred_check
          _
        $region46: #{tpu_custom_call.1} parent=31 // pred_check_branch
          %248 = sbr.rel (%p245) target = $region48
        $region47: #{tpu_custom_call.1} parent=31 // pred_region
          %s249 = scalar_lea.smem [#allocation7], 0
          %250 = sst [smem:[%s249]] 0.0
        $region48: #{tpu_custom_call.1} parent=31 // pred_fallthru
          _
        %v251 = vld [vmem:[%s201] sm:$0xff]
        %v252 = vmul.f32 %v251, %v251
        %253 = vadd.xlane.f32.xlu0 %v252
        %v254 = vpop.xlane.xlu0 %253
        %v255 = vmax.f32 %v254, 1e-16
        %v256 = vrsqrt.pop %v255
        %v257 = vmul.f32 %v251, %v256
        %v258 = vpack.c.bf16 %v257, %v257
        %v259 = vld [vmem:[#allocation2] sm:$0xf]
        %260 = vmatprep.subr.bf16.mxu0 0
        %261 = vmatpush1.bf16.xpose.msra.mxu0 %v258
        %262 = vmatprep.subr.bf16.mxu0 0
        %263 = vmatpush1.bf16.xpose.msra.mxu0 0
        %264 = vmatprep.subr.bf16.mxu0 0
        %265 = vmatpush1.bf16.xpose.msra.mxu0 0
        %266 = vmatprep.subr.bf16.mxu0 0
        %267 = vmatpush1.bf16.xpose.msra.mxu0 0
        %268 = vmatprep.subr.bf16.mxu0 0
        %269 = vmatpush1.bf16.xpose.msra.mxu0 0
        %270 = vmatprep.subr.bf16.mxu0 0
        %271 = vmatpush1.bf16.xpose.msra.mxu0 0
        %272 = vmatprep.subr.bf16.mxu0 0
        %273 = vmatpush1.bf16.xpose.msra.mxu0 0
        %274 = vmatprep.subr.bf16.mxu0 0
        %275 = vmatpush1.bf16.xpose.msra.mxu0 0
        %276 = vmatprep.subr.bf16.mxu0 0
        %277 = vmatpush1.bf16.xpose.msra.mxu0 0
        %278 = vmatprep.subr.bf16.mxu0 0
        %279 = vmatpush1.bf16.xpose.msra.mxu0 0
        %280 = vmatprep.subr.bf16.mxu0 0
        %281 = vmatpush1.bf16.xpose.msra.mxu0 0
        %282 = vmatprep.subr.bf16.mxu0 0
        %283 = vmatpush1.bf16.xpose.msra.mxu0 0
        %284 = vmatprep.subr.bf16.mxu0 0
        %285 = vmatpush1.bf16.xpose.msra.mxu0 0
        %286 = vmatprep.subr.bf16.mxu0 0
        %287 = vmatpush1.bf16.xpose.msra.mxu0 0
        %288 = vmatprep.subr.bf16.mxu0 0
        %289 = vmatpush1.bf16.xpose.msra.mxu0 0
        %290 = vmatprep.subr.bf16.mxu0 0
        %291 = vmatpush1.bf16.xpose.msra.mxu0 0
        %292 = vmatprep.mubr.bf16.mxu0 0
        %293 = vmatmul.mubr.bf16.gmra.mrb[0].mxu0 %v259
        %v294 = vpop.f32.mrb[0].mxu0
        %v295 = vadd.f32 0.0, %v294
        %v296 = vpop.f32.mrb[0].mxu0
        %v297 = vpop.f32.mrb[0].mxu0
        %v298 = vpop.f32.mrb[0].mxu0
        %299 = vdwg.mxu0
        %p300 = scmp.eq.s32.totalorder %s27, %s26
        // Predicated region
        $region49: #{tpu_custom_call.1} parent=31 // pred_check
          %p301 = pneg %p300
        $region50: #{tpu_custom_call.1} parent=31 // pred_check_branch
          %303 = sbr.rel (%p301) target = $region52
        $region51: #{tpu_custom_call.1} parent=31 // pred_region
          %v304 = vunpack.c.l.bf16 %v259
          %v305 = vunpack.c.l.bf16 %v258
          %v306 = vmul.f32 %v304, %v305
          %307 = vadd.xlane.f32.xlu0 %v306
          %v308 = vpop.xlane.xlu0 %307
          %s309 = sld [smem:[#allocation7]]
          %vm310 = vcmask 7168
          %v311 = vsel %vm310, %v308, 0.0
          %312 = vadd.xlane.f32.xlu0 %v311
          %v313 = vpop.xlane.xlu0 %312
          %v314 = vrot.slane %v313, 4
          %v315 = vadd.f32 %v313, %v314
          %v316 = vrot.slane %v315, 2
          %v317 = vadd.f32 %v315, %v316
          %v318 = vrot.slane %v317, 1
          %v319 = vadd.f32 %v317, %v318
          %s320 = vtos %v319
          %s321 = smul.f32 %s320, 0.03125
          %s322 = ssub.f32 %s309, %s321
          %s323 = scalar_lea.smem [#allocation7], 0
          %324 = sst [smem:[%s323]] %s322
        $region52: #{tpu_custom_call.1} parent=31 // pred_fallthru
          _
        %v325 = vld [vmem:[#allocation3] sm:$0xff]
        %vm326 = vcmask 64512
        %v327 = vsel %vm326, %v295, -inf
        %328 = vmax.xlane.f32.xlu0 %v327
        %v329 = vpop.xlane.xlu0 %328
        %v330 = vmax.f32 %v325, %v329
        %332 = vset.pattern.permute.xlu0 0
        %333 = vperm.xlu0 %332, %v330
        %v334 = vpop.permute.xlu0 %333
        %v336 = vsub.f32 %v295, %v334
        %v337 = vmul.f32 %v336, 1.442695
        %v338 = vpow.pop %v337
        %v339 = vld [vmem:[#allocation4] sm:$0xff]
        %v340 = vsub.f32 %v325, %v330
        %v341 = vmul.f32 %v340, 1.442695
        %v342 = vpow.pop %v341
        %v343 = vmul.f32 %v339, %v342
        %v344 = vsel %vm326, %v338, 0.0
        %345 = vadd.xlane.f32.xlu0 %v344
        %v346 = vpop.xlane.xlu0 %345
        %v347 = vadd.f32 %v343, %v346
        %vm348 = vcmask 7168
        %349 = vst.msk [vmem:[#allocation4] sm:$0xff] %vm348, %v347
        %350 = vst.msk [vmem:[#allocation3] sm:$0xff] %vm348, %v330
        %v351 = vrot.slane %v327, 4
        %v352 = vmax.f32 %v327, %v351
        %v353 = vrot.slane %v352, 2
        %v354 = vmax.f32 %v352, %v353
        %v355 = vrot.slane %v354, 1
        %v356 = vmax.f32 %v354, %v355
        %v357 = vsub.f32 %v295, %v356
        %v358 = vmul.f32 %v357, 1.442695
        %v359 = vpow.pop %v358
        %v360 = vsel %vm326, %v359, 0.0
        %v361 = vrot.slane %v360, 4
        %v362 = vadd.f32 %v360, %v361
        %v363 = vrot.slane %v362, 2
        %v364 = vadd.f32 %v362, %v363
        %v365 = vrot.slane %v364, 1
        %v366 = vadd.f32 %v364, %v365
        // Predicated region
        $region53: #{tpu_custom_call.1} parent=31 // pred_check
          %p367 = pneg %p244
        $region54: #{tpu_custom_call.1} parent=31 // pred_check_branch
          %369 = sbr.rel (%p367) target = $region56
        $region55: #{tpu_custom_call.1} parent=31 // pred_region
          %s370 = scalar_lea.vmem [#allocation5], %s27
          %vm371 = vcmask 57344
          %372 = vst.msk [vmem:[%s370] sm:$0x1] %vm371, %v356
          %s373 = scalar_lea.vmem [#allocation6], %s27
          %374 = vst.msk [vmem:[%s373] sm:$0x1] %vm371, %v366
        $region56: #{tpu_custom_call.1} parent=31 // pred_fallthru
          _
        %p375 = scmp.gt.s32.totalorder %s26, 0
        // Predicated region
        $region57: #{tpu_custom_call.1} parent=31 // pred_check
          %p376 = pneg %p375
        $region58: #{tpu_custom_call.1} parent=31 // pred_check_branch
          %378 = sbr.rel (%p376) target = $region60
        $region59: #{tpu_custom_call.1} parent=31 // pred_region
          %s379 = scalar_lea.vmem [#allocation5], %s27
          %v380 = vld [vmem:[%s379] sm:$0x1]
          %v381 = vmax.f32 %v380, %v356
          %s382 = scalar_lea.vmem [#allocation6], %s27
          %v383 = vld [vmem:[%s382] sm:$0x1]
          %v384 = vsub.f32 %v380, %v381
          %v385 = vmul.f32 %v384, 1.442695
          %v386 = vpow.pop %v385
          %v387 = vmul.f32 %v383, %v386
          %v388 = vsub.f32 %v356, %v381
          %v389 = vmul.f32 %v388, 1.442695
          %v390 = vpow.pop %v389
          %v391 = vmul.f32 %v366, %v390
          %v392 = vadd.f32 %v387, %v391
          %vm393 = vcmask 57344
          %394 = vst.msk [vmem:[%s382] sm:$0x1] %vm393, %v392
          %395 = vst.msk [vmem:[%s379] sm:$0x1] %vm393, %v381
        $region60: #{tpu_custom_call.1} parent=31 // pred_fallthru
          _
        %p396 = scmp.eq.s32.totalorder %s27, 3
        // Predicated region
        $region61: #{tpu_custom_call.1} parent=31 // pred_check
          %p397 = pneg %p396
        $region62: #{tpu_custom_call.1} parent=31 // pred_check_branch
          %399 = sbr.rel (%p397) target = $region64
        $region63: #{tpu_custom_call.1} parent=31 // pred_region
          %v400 = vld [vmem:[#allocation3] sm:$0xff]
          %v401 = vld [vmem:[#allocation4] sm:$0xff]
          %v402 = vlog2.pop %v401
          %v403 = vmul.f32 %v402, 0.6931472
          %v404 = vadd.f32 %v400, %v403
          %s405 = sld [smem:[#allocation7]]
          %v406 = vsel %vm348, %v404, 0.0
          %407 = vadd.xlane.f32.xlu0 %v406
          %v408 = vpop.xlane.xlu0 %407
          %v409 = vrot.slane %v408, 4
          %v410 = vadd.f32 %v408, %v409
          %v411 = vrot.slane %v410, 2
          %v412 = vadd.f32 %v410, %v411
          %v413 = vrot.slane %v412, 1
          %v414 = vadd.f32 %v412, %v413
          %s415 = vtos %v414
          %s416 = smul.f32 %s415, 0.015625
          %s417 = sadd.f32 %s405, %s416
          %s418 = scalar_lea.smem [#allocation7], 0
          %419 = sst [smem:[%s418]] %s417
        $region64: #{tpu_custom_call.1} parent=31 // pred_fallthru
          _
        %p420 = scmp.eq.s32.totalorder %s26, 3
        // Predicated region
        $region65: #{tpu_custom_call.1} parent=31 // pred_check
          %p421 = pneg %p420
        $region66: #{tpu_custom_call.1} parent=31 // pred_check_branch
          %423 = sbr.rel (%p421) target = $region68
        $region67: #{tpu_custom_call.1} parent=31 // pred_region
          %s424 = scalar_lea.vmem [#allocation5], %s27
          %v425 = vld [vmem:[%s424] sm:$0x1]
          %s426 = scalar_lea.vmem [#allocation6], %s27
          %v427 = vld [vmem:[%s426] sm:$0x1]
          %v428 = vlog2.pop %v427
          %v429 = vmul.f32 %v428, 0.6931472
          %v430 = vadd.f32 %v425, %v429
          %s431 = sld [smem:[#allocation7]]
          %vm432 = vcmask 57344
          %v433 = vsel %vm432, %v430, 0.0
          %434 = vadd.xlane.f32.xlu0 %v433
          %v435 = vpop.xlane.xlu0 %434
          %v436 = vrot.slane %v435, 4
          %v437 = vadd.f32 %v435, %v436
          %v438 = vrot.slane %v437, 2
          %v439 = vadd.f32 %v437, %v438
          %v440 = vrot.slane %v439, 1
          %v441 = vadd.f32 %v439, %v440
          %s442 = vtos %v441
          %s443 = smul.f32 %s442, 0.015625
          %s444 = sadd.f32 %s431, %s443
          %s445 = scalar_lea.smem [#allocation7], 0
          %446 = sst [smem:[%s445]] %s444
        $region68: #{tpu_custom_call.1} parent=31 // pred_fallthru
          _
        %p447 = pnand %p420, %p396
        %p448 = pneg %p447
        // Predicated region
        $region69: #{tpu_custom_call.1} parent=31 // pred_check
          _
        $region70: #{tpu_custom_call.1} parent=31 // pred_check_branch
          %450 = sbr.rel (%p447) target = $region72
        $region71: #{tpu_custom_call.1} parent=31 // pred_region
          %s451 = sld [smem:[#allocation7]]
          %s452 = scalar_lea.smem [#allocation14], 0
          %453 = sst [smem:[%s452]] %s451
        $region72: #{tpu_custom_call.1} parent=31 // pred_fallthru
          _
        // Predicated region
        $region73: #{tpu_custom_call.1} parent=31 // pred_check
          %p454 = pneg %p120
        $region74: #{tpu_custom_call.1} parent=31 // pred_check_branch
          %456 = sbr.rel (%p454) target = $region76
        $region75: #{tpu_custom_call.1} parent=31 // pred_region
          %s458 = ssub.s32 16, 16
          %459 = vsyncadd [#allocation11], %s458
          %462 = dma.smem_to_hbm [#allocation14], 16, %s3, [#allocation11]
        $region76: #{tpu_custom_call.1} parent=31 // pred_fallthru
          _
        // Predicated region
        $region77: #{tpu_custom_call.1} parent=31 // pred_check
          %p463 = pneg %p120
        $region78: #{tpu_custom_call.1} parent=31 // pred_check_branch
          %465 = sbr.rel (%p463) target = $region80
        $region79: #{tpu_custom_call.1} parent=31 // pred_region
          %466 = dma.done [#allocation11], 16
        $region80: #{tpu_custom_call.1} parent=31 // pred_fallthru
          _
        %467 = sfence
      $region32: #{tpu_custom_call.1} parent=5 // pred_fallthru
        _
      %p468 = scmp.le.s32.totalorder 2, %s17
      // Predicated region
      $region81: #{tpu_custom_call.1} parent=5 // pred_check
        %p469 = pneg %p468
      $region82: #{tpu_custom_call.1} parent=5 // pred_check_branch
        %471 = sbr.rel (%p469) target = $region84
      $region83: #{tpu_custom_call.1} parent=5 // pred_region
        %s472 = ssub.s32 %s17, 2
      $region84: #{tpu_custom_call.1} parent=5 // pred_fallthru
        _
    $region6: #{tpu_custom_call.1} parent=1 // loop_footer
      %s21 = sadd.s32 1, %s17
    $region7: #{tpu_custom_call.1} parent=1 // loop_footer_branch
      %16 = sbr.rel target = $region3
    $region8: #{tpu_custom_call.1} parent=1 // loop_exit
      _
    %473 = vsyncpa [#allocation10], 1
    %s474 = scalar_lea.sflag [#allocation10], 1
    %475 = vsyncpa %s474, 1
    %476 = vsyncpa [#allocation13], 1
    %s477 = scalar_lea.sflag [#allocation13], 1
    %478 = vsyncpa %s477, 1
    %479 = vsyncpa [#allocation11], 1
    %s480 = scalar_lea.sflag [#allocation11], 1
    %481 = vsyncpa %s480, 1

</llo_original>
